<compile_context>
chip_gen: v6e
topology: v6e:2x2x1
jax: 0.10.0
libtpu: 0.0.40
codegen_flags: <defaults>
</compile_context>

<pallas_src>
import functools

import jax
import jax.numpy as jnp
from jax.experimental import pallas as pl
from jax.experimental.pallas import tpu as pltpu


def _round_up(n, m):
    return ((n + m - 1) // m) * m


def mlp_kernel(x_ref,
               w0_ref, b0_ref,
               w1_ref, b1_ref,
               w2_ref, b2_ref,
               w3_ref, b3_ref,
               o_ref,
               *, matmul_dtype):
    # In-kernel cast: x stays f32 in HBM, the cast rides the (idle) VPU.
    x = x_ref[...].astype(matmul_dtype)

    # layer_input: Linear(dim_in, 128) -> dropout(identity) -> ReLU
    h = jnp.dot(x, w0_ref[...], preferred_element_type=jnp.float32) + b0_ref[...]
    h = jnp.maximum(h, 0.0)

    # fc1: Linear(128, 64) -> ReLU   (f32 accumulate, matmul inputs in matmul_dtype)
    h = jnp.dot(h.astype(matmul_dtype), w1_ref[...],
                preferred_element_type=jnp.float32) + b1_ref[...]
    h = jnp.maximum(h, 0.0)

    # fc2: Linear(64, 32) -> ReLU
    h = jnp.dot(h.astype(matmul_dtype), w2_ref[...],
                preferred_element_type=jnp.float32) + b2_ref[...]
    h = jnp.maximum(h, 0.0)

    # output: Linear(32, dim_out) -> Sigmoid (exact, single EUP transcendental).
    z = jnp.dot(h.astype(matmul_dtype), w3_ref[...],
                preferred_element_type=jnp.float32) + b3_ref[...]
    o_ref[...] = (0.5 * jnp.tanh(0.5 * z) + 0.5).astype(o_ref.dtype)


def mlp_forward(x, params, *, tile_b=2048, matmul_dtype=jnp.bfloat16):
    """x: (B, dim_in) float32. params: dict of (fan_in, fan_out) weights, (1, fan_out) biases."""
    B, dim_in = x.shape
    dim_out = params["w3"].shape[1]

    # --- tile selection -------------------------------------------------------
    # Sublane-aligned batch tile, never larger than the (sublane-rounded) batch.
    tile_b = max(8, min(_round_up(tile_b, 8), _round_up(B, 8)))
    grid = (pl.cdiv(B, tile_b),)   # ragged last block handled by Pallas masking

    # --- operands (no padding, no extra HBM pass over x) ----------------------
    w0 = params["w0"].astype(matmul_dtype)
    w1 = params["w1"].astype(matmul_dtype)
    w2 = params["w2"].astype(matmul_dtype)
    w3 = params["w3"].astype(matmul_dtype)
    b0 = params["b0"].astype(jnp.float32)
    b1 = params["b1"].astype(jnp.float32)
    b2 = params["b2"].astype(jnp.float32)
    b3 = params["b3"].astype(jnp.float32)

    # --- specs ----------------------------------------------------------------
    def row_map(i):
        return (i, 0)

    def whole(i):
        return (0, 0)

    in_specs = [
        pl.BlockSpec((tile_b, dim_in), row_map),   # x: streamed along batch
        pl.BlockSpec(w0.shape, whole),             # weights/biases: VMEM-resident
        pl.BlockSpec(b0.shape, whole),
        pl.BlockSpec(w1.shape, whole),
        pl.BlockSpec(b1.shape, whole),
        pl.BlockSpec(w2.shape, whole),
        pl.BlockSpec(b2.shape, whole),
        pl.BlockSpec(w3.shape, whole),
        pl.BlockSpec(b3.shape, whole),
    ]
    out_spec = pl.BlockSpec((tile_b, dim_out), row_map)

    kernel = functools.partial(mlp_kernel, matmul_dtype=matmul_dtype)

    return pl.pallas_call(
        kernel,
        out_shape=jax.ShapeDtypeStruct((B, dim_out), jnp.float32),
        grid_spec=pltpu.PrefetchScalarGridSpec(
            num_scalar_prefetch=0,
            grid=grid,
            in_specs=in_specs,
            out_specs=out_spec,
        ),
        compiler_params=pltpu.CompilerParams(
            dimension_semantics=("parallel",),
        ),
    )(x, w0, b0, w1, b1, w2, b2, w3, b3)


def init_params(key, dim_in, dim_out):
    """Deterministic init mimicking nn.Linear default: U(-1/sqrt(fan_in), 1/sqrt(fan_in))."""
    sizes = [(dim_in, 128), (128, 64), (64, 32), (32, dim_out)]
    params = {}
    keys = jax.random.split(key, 2 * len(sizes))
    for i, (fi, fo) in enumerate(sizes):
        bound = 1.0 / (fi ** 0.5)
        params[f"w{i}"] = jax.random.uniform(
            keys[2 * i], (fi, fo), jnp.float32, minval=-bound, maxval=bound)
        params[f"b{i}"] = jax.random.uniform(
            keys[2 * i + 1], (1, fo), jnp.float32, minval=-bound, maxval=bound)
    return params


def mlp_reference(x, params):
    h = jnp.maximum(x @ params["w0"] + params["b0"], 0.0)
    h = jnp.maximum(h @ params["w1"] + params["b1"], 0.0)
    h = jnp.maximum(h @ params["w2"] + params["b2"], 0.0)
    z = h @ params["w3"] + params["b3"]
    return jax.nn.sigmoid(z)


if __name__ == "__main__":
    key = jax.random.PRNGKey(0)
    k_x, k_x2, k_p = jax.random.split(key, 3)

    dim_in, dim_out = 16, 10
    params = init_params(k_p, dim_in, dim_out)

    # Case 1: small batch, full-f32 matmul path (tile clamps to the batch).
    x_small = jax.random.normal(k_x, (8, dim_in), jnp.float32)
    out_small = jax.block_until_ready(
        mlp_forward(x_small, params, matmul_dtype=jnp.float32))
    ref_small = mlp_reference(x_small, params)
    assert out_small.shape == (8, dim_out)
    assert jnp.allclose(out_small, ref_small, atol=1e-4, rtol=1e-4), \
        "f32 path mismatch vs JAX reference"

    # Case 2: larger, non-tile-divisible batch (ragged last block, multi-step grid),
    # default bf16 matmul operands with f32 accumulation.
    x_big = jax.random.normal(k_x2, (300, dim_in), jnp.float32)
    out_big = jax.block_until_ready(mlp_forward(x_big, params, tile_b=128))
    ref_big = mlp_reference(x_big, params)
    assert out_big.shape == (300, dim_out)
    assert jnp.allclose(out_big, ref_big, atol=5e-2, rtol=5e-2), \
        "bf16 path mismatch vs JAX reference"

    print("KERNEL_OK")
</pallas_src>

<mosaic_0001>
module attributes {stable_mosaic.version = 11 : i64} {
  func.func @mlp_kernel(%arg0: i32, %arg1: memref<8x16xf32, #tpu.memory_space<vmem>>, %arg2: memref<16x128xf32, #tpu.memory_space<vmem>>, %arg3: memref<1x128xf32, #tpu.memory_space<vmem>>, %arg4: memref<128x64xf32, #tpu.memory_space<vmem>>, %arg5: memref<1x64xf32, #tpu.memory_space<vmem>>, %arg6: memref<64x32xf32, #tpu.memory_space<vmem>>, %arg7: memref<1x32xf32, #tpu.memory_space<vmem>>, %arg8: memref<32x10xf32, #tpu.memory_space<vmem>>, %arg9: memref<1x10xf32, #tpu.memory_space<vmem>>, %arg10: memref<8x10xf32, #tpu.memory_space<vmem>>) attributes {dimension_semantics = [#tpu.dimension_semantics<parallel>], iteration_bounds = array<i64: 1>, scalar_prefetch = 0 : i64, scratch_operands = 0 : i64, tpu.core_type = #tpu.core_type<tc>, window_params = [{transform_indices = @transform_0, window_bounds = array<i64: 8, 16>}, {pipeline_mode = #tpu.pipeline_mode<synchronous>, transform_indices = @transform_1, window_bounds = array<i64: 16, 128>}, {pipeline_mode = #tpu.pipeline_mode<synchronous>, transform_indices = @transform_2, window_bounds = array<i64: 1, 128>}, {pipeline_mode = #tpu.pipeline_mode<synchronous>, transform_indices = @transform_3, window_bounds = array<i64: 128, 64>}, {pipeline_mode = #tpu.pipeline_mode<synchronous>, transform_indices = @transform_4, window_bounds = array<i64: 1, 64>}, {pipeline_mode = #tpu.pipeline_mode<synchronous>, transform_indices = @transform_5, window_bounds = array<i64: 64, 32>}, {pipeline_mode = #tpu.pipeline_mode<synchronous>, transform_indices = @transform_6, window_bounds = array<i64: 1, 32>}, {pipeline_mode = #tpu.pipeline_mode<synchronous>, transform_indices = @transform_7, window_bounds = array<i64: 32, 10>}, {pipeline_mode = #tpu.pipeline_mode<synchronous>, transform_indices = @transform_8, window_bounds = array<i64: 1, 10>}, {transform_indices = @transform_9, window_bounds = array<i64: 8, 10>}]} {
    %c0 = arith.constant 0 : index
    %c0_0 = arith.constant 0 : index
    %0 = vector.load %arg1[%c0, %c0_0] : memref<8x16xf32, #tpu.memory_space<vmem>>, vector<8x16xf32>
    %c0_1 = arith.constant 0 : index
    %c0_2 = arith.constant 0 : index
    %1 = vector.load %arg2[%c0_1, %c0_2] : memref<16x128xf32, #tpu.memory_space<vmem>>, vector<16x128xf32>
    %cst = arith.constant dense<0.000000e+00> : vector<8x128xf32>
    %2 = tpu.matmul %0, %1, %cst {dimension_numbers = #tpu.dot_dimension_numbers<[1], [0], [0], [1], [0, 0, 1, 1], [], []>} : vector<8x16xf32>, vector<16x128xf32>, vector<8x128xf32> -> vector<8x128xf32>
    %c0_3 = arith.constant 0 : index
    %c0_4 = arith.constant 0 : index
    %3 = vector.load %arg3[%c0_3, %c0_4] : memref<1x128xf32, #tpu.memory_space<vmem>>, vector<1x128xf32>
    %4 = vector.broadcast %3 : vector<1x128xf32> to vector<8x128xf32>
    %5 = arith.addf %2, %4 : vector<8x128xf32>
    %cst_5 = arith.constant 0.000000e+00 : f32
    %6 = vector.broadcast %cst_5 : f32 to vector<8x128xf32>
    %7 = arith.maximumf %5, %6 : vector<8x128xf32>
    %c0_6 = arith.constant 0 : index
    %c0_7 = arith.constant 0 : index
    %8 = vector.load %arg4[%c0_6, %c0_7] : memref<128x64xf32, #tpu.memory_space<vmem>>, vector<128x64xf32>
    %cst_8 = arith.constant dense<0.000000e+00> : vector<8x64xf32>
    %9 = tpu.matmul %7, %8, %cst_8 {dimension_numbers = #tpu.dot_dimension_numbers<[1], [0], [0], [1], [0, 0, 1, 1], [], []>} : vector<8x128xf32>, vector<128x64xf32>, vector<8x64xf32> -> vector<8x64xf32>
    %c0_9 = arith.constant 0 : index
    %c0_10 = arith.constant 0 : index
    %10 = vector.load %arg5[%c0_9, %c0_10] : memref<1x64xf32, #tpu.memory_space<vmem>>, vector<1x64xf32>
    %11 = vector.broadcast %10 : vector<1x64xf32> to vector<8x64xf32>
    %12 = arith.addf %9, %11 : vector<8x64xf32>
    %cst_11 = arith.constant 0.000000e+00 : f32
    %13 = vector.broadcast %cst_11 : f32 to vector<8x64xf32>
    %14 = arith.maximumf %12, %13 : vector<8x64xf32>
    %c0_12 = arith.constant 0 : index
    %c0_13 = arith.constant 0 : index
    %15 = vector.load %arg6[%c0_12, %c0_13] : memref<64x32xf32, #tpu.memory_space<vmem>>, vector<64x32xf32>
    %cst_14 = arith.constant dense<0.000000e+00> : vector<8x32xf32>
    %16 = tpu.matmul %14, %15, %cst_14 {dimension_numbers = #tpu.dot_dimension_numbers<[1], [0], [0], [1], [0, 0, 1, 1], [], []>} : vector<8x64xf32>, vector<64x32xf32>, vector<8x32xf32> -> vector<8x32xf32>
    %c0_15 = arith.constant 0 : index
    %c0_16 = arith.constant 0 : index
    %17 = vector.load %arg7[%c0_15, %c0_16] : memref<1x32xf32, #tpu.memory_space<vmem>>, vector<1x32xf32>
    %18 = vector.broadcast %17 : vector<1x32xf32> to vector<8x32xf32>
    %19 = arith.addf %16, %18 : vector<8x32xf32>
    %cst_17 = arith.constant 0.000000e+00 : f32
    %20 = vector.broadcast %cst_17 : f32 to vector<8x32xf32>
    %21 = arith.maximumf %19, %20 : vector<8x32xf32>
    %c0_18 = arith.constant 0 : index
    %c0_19 = arith.constant 0 : index
    %22 = vector.load %arg8[%c0_18, %c0_19] : memref<32x10xf32, #tpu.memory_space<vmem>>, vector<32x10xf32>
    %cst_20 = arith.constant dense<0.000000e+00> : vector<8x10xf32>
    %23 = tpu.matmul %21, %22, %cst_20 {dimension_numbers = #tpu.dot_dimension_numbers<[1], [0], [0], [1], [0, 0, 1, 1], [], []>} : vector<8x32xf32>, vector<32x10xf32>, vector<8x10xf32> -> vector<8x10xf32>
    %c0_21 = arith.constant 0 : index
    %c0_22 = arith.constant 0 : index
    %24 = vector.load %arg9[%c0_21, %c0_22] : memref<1x10xf32, #tpu.memory_space<vmem>>, vector<1x10xf32>
    %25 = vector.broadcast %24 : vector<1x10xf32> to vector<8x10xf32>
    %26 = arith.addf %23, %25 : vector<8x10xf32>
    %cst_23 = arith.constant 5.000000e-01 : f32
    %27 = vector.broadcast %cst_23 : f32 to vector<8x10xf32>
    %28 = arith.mulf %27, %26 : vector<8x10xf32>
    %29 = math.tanh %28 : vector<8x10xf32>
    %cst_24 = arith.constant 5.000000e-01 : f32
    %30 = vector.broadcast %cst_24 : f32 to vector<8x10xf32>
    %31 = arith.mulf %30, %29 : vector<8x10xf32>
    %cst_25 = arith.constant 5.000000e-01 : f32
    %32 = vector.broadcast %cst_25 : f32 to vector<8x10xf32>
    %33 = arith.addf %31, %32 : vector<8x10xf32>
    %c0_26 = arith.constant 0 : index
    %c0_27 = arith.constant 0 : index
    %34 = vector.load %arg10[%c0_26, %c0_27] : memref<8x10xf32, #tpu.memory_space<vmem>>, vector<8x10xf32>
    tpu.vector_store %arg10[%c0_26, %c0_27], %33 {strides = array<i32>} : memref<8x10xf32, #tpu.memory_space<vmem>>, vector<8x10xf32>,
    return
  }
  func.func @transform_0(%arg0: i32) -> (i32, i32) {
    %c0_i32 = arith.constant 0 : i32
    %c0_i32_0 = arith.constant 0 : i32
    return %arg0, %c0_i32 : i32, i32
  }
  func.func @transform_1(%arg0: i32) -> (i32, i32) {
    %c0_i32 = arith.constant 0 : i32
    %c0_i32_0 = arith.constant 0 : i32
    %c0_i32_1 = arith.constant 0 : i32
    return %c0_i32, %c0_i32_0 : i32, i32
  }
  func.func @transform_2(%arg0: i32) -> (i32, i32) {
    %c0_i32 = arith.constant 0 : i32
    %c0_i32_0 = arith.constant 0 : i32
    %c0_i32_1 = arith.constant 0 : i32
    return %c0_i32, %c0_i32_0 : i32, i32
  }
  func.func @transform_3(%arg0: i32) -> (i32, i32) {
    %c0_i32 = arith.constant 0 : i32
    %c0_i32_0 = arith.constant 0 : i32
    %c0_i32_1 = arith.constant 0 : i32
    return %c0_i32, %c0_i32_0 : i32, i32
  }
  func.func @transform_4(%arg0: i32) -> (i32, i32) {
    %c0_i32 = arith.constant 0 : i32
    %c0_i32_0 = arith.constant 0 : i32
    %c0_i32_1 = arith.constant 0 : i32
    return %c0_i32, %c0_i32_0 : i32, i32
  }
  func.func @transform_5(%arg0: i32) -> (i32, i32) {
    %c0_i32 = arith.constant 0 : i32
    %c0_i32_0 = arith.constant 0 : i32
    %c0_i32_1 = arith.constant 0 : i32
    return %c0_i32, %c0_i32_0 : i32, i32
  }
  func.func @transform_6(%arg0: i32) -> (i32, i32) {
    %c0_i32 = arith.constant 0 : i32
    %c0_i32_0 = arith.constant 0 : i32
    %c0_i32_1 = arith.constant 0 : i32
    return %c0_i32, %c0_i32_0 : i32, i32
  }
  func.func @transform_7(%arg0: i32) -> (i32, i32) {
    %c0_i32 = arith.constant 0 : i32
    %c0_i32_0 = arith.constant 0 : i32
    %c0_i32_1 = arith.constant 0 : i32
    return %c0_i32, %c0_i32_0 : i32, i32
  }
  func.func @transform_8(%arg0: i32) -> (i32, i32) {
    %c0_i32 = arith.constant 0 : i32
    %c0_i32_0 = arith.constant 0 : i32
    %c0_i32_1 = arith.constant 0 : i32
    return %c0_i32, %c0_i32_0 : i32, i32
  }
  func.func @transform_9(%arg0: i32) -> (i32, i32) {
    %c0_i32 = arith.constant 0 : i32
    %c0_i32_0 = arith.constant 0 : i32
    return %arg0, %c0_i32 : i32, i32
  }
}

</mosaic_0001>

<llo_original>
// kernel: tpu_custom_call.1
$region0: #{tpu_custom_call.1}
  #allocation0 [shape = 'u32[]', space=smem, size = 0x4, offset = 0x4, fixed_abs, tag = 'smem constant byte address 0x4 - core index']
  #allocation1 [shape = 'u32[144,128]{1,0:T(1,128)}', space=vmem, size = 0x12000, scoped, tag = 'internal scratch']
  %s0 = inlined_call_operand.vmem [shape: f32[8,16], index: 0, kind: input, shape index: {}]
  %s1 = inlined_call_operand.vmem [shape: f32[16,128], index: 1, kind: input, shape index: {}]
  %s2 = inlined_call_operand.vmem [shape: f32[1,128], index: 2, kind: input, shape index: {}]
  %s3 = inlined_call_operand.vmem [shape: f32[128,64], index: 3, kind: input, shape index: {}]
  %s4 = inlined_call_operand.vmem [shape: f32[1,64], index: 4, kind: input, shape index: {}]
  %s5 = inlined_call_operand.vmem [shape: f32[64,32], index: 5, kind: input, shape index: {}]
  %s6 = inlined_call_operand.vmem [shape: f32[1,32], index: 6, kind: input, shape index: {}]
  %s7 = inlined_call_operand.vmem [shape: f32[32,10], index: 7, kind: input, shape index: {}]
  %s8 = inlined_call_operand.vmem [shape: f32[1,10], index: 8, kind: input, shape index: {}]
  %s9 = inlined_call_operand.hbm [shape: f32[8,10], index: 9, kind: output, shape index: {}]
  %s10 = sld [smem:[#allocation0]]
  $region46: #{tpu_custom_call.1} parent=0
    _
  %s12 = ssub.s32 1, %s10
  %s13 = scalar_select 0, %s12, %s10
  $region1: #{tpu_custom_call.1} parent=0
    #allocation2 [shape = 'u8[4096]{0}', space=vmem, size = 0x1000, scoped, tag = 'output window, operand 0, single buffered']
    #allocation3 [shape = 's32[1]{0}', space=sflag, size = 0x4, scoped, tag = 'scoped memory for tpu_custom_call.1']
    %14 = vsyncpa [#allocation3], 0
    // Predicated region
    $region2: #{tpu_custom_call.1} parent=1 // pred_check
      _
    $region3: #{tpu_custom_call.1} parent=1 // pred_check_branch
      %16 = sbr.rel (0) target = $region5
    $region4: #{tpu_custom_call.1} parent=1 // pred_region
      _
    $region5: #{tpu_custom_call.1} parent=1 // pred_fallthru
      _
    // Predicated region
    $region6: #{tpu_custom_call.1} parent=1 // pred_check
      _
    $region7: #{tpu_custom_call.1} parent=1 // pred_check_branch
      %18 = sbr.rel (0) target = $region9
    $region8: #{tpu_custom_call.1} parent=1 // pred_region
      _
    $region9: #{tpu_custom_call.1} parent=1 // pred_fallthru
      _
    // Predicated region
    $region10: #{tpu_custom_call.1} parent=1 // pred_check
      _
    $region11: #{tpu_custom_call.1} parent=1 // pred_check_branch
      %20 = sbr.rel (0) target = $region13
    $region12: #{tpu_custom_call.1} parent=1 // pred_region
      _
    $region13: #{tpu_custom_call.1} parent=1 // pred_fallthru
      _
    // Predicated region
    $region14: #{tpu_custom_call.1} parent=1 // pred_check
      _
    $region15: #{tpu_custom_call.1} parent=1 // pred_check_branch
      %22 = sbr.rel (0) target = $region17
    $region16: #{tpu_custom_call.1} parent=1 // pred_region
      _
    $region17: #{tpu_custom_call.1} parent=1 // pred_fallthru
      _
    // Predicated region
    $region18: #{tpu_custom_call.1} parent=1 // pred_check
      _
    $region19: #{tpu_custom_call.1} parent=1 // pred_check_branch
      %24 = sbr.rel (0) target = $region21
    $region20: #{tpu_custom_call.1} parent=1 // pred_region
      _
    $region21: #{tpu_custom_call.1} parent=1 // pred_fallthru
      _
    // Predicated region
    $region22: #{tpu_custom_call.1} parent=1 // pred_check
      _
    $region23: #{tpu_custom_call.1} parent=1 // pred_check_branch
      %26 = sbr.rel (0) target = $region25
    $region24: #{tpu_custom_call.1} parent=1 // pred_region
      _
    $region25: #{tpu_custom_call.1} parent=1 // pred_fallthru
      _
    // Predicated region
    $region26: #{tpu_custom_call.1} parent=1 // pred_check
      _
    $region27: #{tpu_custom_call.1} parent=1 // pred_check_branch
      %28 = sbr.rel (0) target = $region29
    $region28: #{tpu_custom_call.1} parent=1 // pred_region
      _
    $region29: #{tpu_custom_call.1} parent=1 // pred_fallthru
      _
    // Predicated region
    $region30: #{tpu_custom_call.1} parent=1 // pred_check
      _
    $region31: #{tpu_custom_call.1} parent=1 // pred_check_branch
      %30 = sbr.rel (0) target = $region33
    $region32: #{tpu_custom_call.1} parent=1 // pred_region
      _
    $region33: #{tpu_custom_call.1} parent=1 // pred_fallthru
      _
    // Predicated region
    $region34: #{tpu_custom_call.1} parent=1 // pred_check
      _
    $region35: #{tpu_custom_call.1} parent=1 // pred_check_branch
      %32 = sbr.rel (0) target = $region37
    $region36: #{tpu_custom_call.1} parent=1 // pred_region
      _
    $region37: #{tpu_custom_call.1} parent=1 // pred_fallthru
      _
    %v33 = vld [vmem:[%s0] sm:$0xff]
    %v34 = vld [vmem:[%s1] sm:$0xff]
    %v35 = vld [vmem:[%s1 + $0x8] sm:$0xff]
    %v36 = vld [vmem:[%s2] sm:$0x1]
    %v38 = vlaneseq
    %v39 = vshrl.u32 %v38, 7
    %v40 = vsub.s32 0, %v39
    %v41 = vrot.slane %v36, %v40
    %vm43 = vcmask 130048
    %v45 = vsel %vm43, %v33, 0
    %47 = vmatprep.subr.mxu0 0.0
    %48 = vmatpush1.msra.mxu0 0.0
    %49 = vmatprep.subr.mxu0 0.0
    %50 = vmatpush1.msra.mxu0 0.0
    %51 = vmatprep.subr.mxu0 0.0
    %52 = vmatpush1.msra.mxu0 0.0
    %53 = vmatprep.subr.mxu0 0.0
    %54 = vmatpush1.msra.mxu0 0.0
    %55 = vmatprep.subr.mxu0 0.0
    %56 = vmatpush1.msra.mxu0 0.0
    %57 = vmatprep.subr.mxu0 0.0
    %58 = vmatpush1.msra.mxu0 0.0
    %59 = vmatprep.subr.mxu0 0.0
    %60 = vmatpush1.msra.mxu0 0.0
    %61 = vmatprep.subr.mxu0 0.0
    %62 = vmatpush1.msra.mxu0 0.0
    %63 = vmatprep.subr.mxu0 0.0
    %64 = vmatpush1.msra.mxu0 0.0
    %65 = vmatprep.subr.mxu0 0.0
    %66 = vmatpush1.msra.mxu0 0.0
    %67 = vmatprep.subr.mxu0 0.0
    %68 = vmatpush1.msra.mxu0 0.0
    %69 = vmatprep.subr.mxu0 0.0
    %70 = vmatpush1.msra.mxu0 0.0
    %71 = vmatprep.subr.mxu0 0.0
    %72 = vmatpush1.msra.mxu0 0.0
    %73 = vmatprep.subr.mxu0 0.0
    %74 = vmatpush1.msra.mxu0 0.0
    %75 = vmatprep.subr.mxu0 0.0
    %76 = vmatpush1.msra.mxu0 %v35
    %77 = vmatprep.subr.mxu0 0.0
    %78 = vmatpush1.msra.mxu0 %v34
    %79 = vmatprep.subr.mxu0 0.0
    %80 = vmatpush2.msra.mxu0 0.0
    %81 = vmatprep.subr.mxu0 0.0
    %82 = vmatpush2.msra.mxu0 0.0
    %83 = vmatprep.subr.mxu0 0.0
    %84 = vmatpush2.msra.mxu0 0.0
    %85 = vmatprep.subr.mxu0 0.0
    %86 = vmatpush2.msra.mxu0 0.0
    %87 = vmatprep.subr.mxu0 0.0
    %88 = vmatpush2.msra.mxu0 0.0
    %89 = vmatprep.subr.mxu0 0.0
    %90 = vmatpush2.msra.mxu0 0.0
    %91 = vmatprep.subr.mxu0 0.0
    %92 = vmatpush2.msra.mxu0 0.0
    %93 = vmatprep.subr.mxu0 0.0
    %94 = vmatpush2.msra.mxu0 0.0
    %95 = vmatprep.subr.mxu0 0.0
    %96 = vmatpush2.msra.mxu0 0.0
    %97 = vmatprep.subr.mxu0 0.0
    %98 = vmatpush2.msra.mxu0 0.0
    %99 = vmatprep.subr.mxu0 0.0
    %100 = vmatpush2.msra.mxu0 0.0
    %101 = vmatprep.subr.mxu0 0.0
    %102 = vmatpush2.msra.mxu0 0.0
    %103 = vmatprep.subr.mxu0 0.0
    %104 = vmatpush2.msra.mxu0 0.0
    %105 = vmatprep.subr.mxu0 0.0
    %106 = vmatpush2.msra.mxu0 0.0
    %107 = vmatprep.subr.mxu0 0.0
    %108 = vmatpush2.msra.mxu0 0.0
    %109 = vmatprep.subr.mxu0 0.0
    %110 = vmatpush2.msra.mxu0 0.0
    %111 = vmatprep.mubr.f32.mxu0 0.0
    %112 = vmatmul.mubr.f32.gmra.mxu0 %v45
    %v113 = vpop.f32.mrf.mxu0
    %v114 = vadd.f32 %v41, %v113
    %v115 = vpop.f32.mrf.mxu0
    %116 = vdwg.mxu0
    %v117 = vmax.f32 %v114, 0.0
    %v118 = vld [vmem:[%s3] sm:$0xff]
    %v119 = vld [vmem:[%s3 + $0x8] sm:$0xff]
    %v120 = vld [vmem:[%s3 + $0x10] sm:$0xff]
    %v121 = vld [vmem:[%s3 + $0x18] sm:$0xff]
    %v122 = vld [vmem:[%s3 + $0x20] sm:$0xff]
    %v123 = vld [vmem:[%s3 + $0x28] sm:$0xff]
    %v124 = vld [vmem:[%s3 + $0x30] sm:$0xff]
    %v125 = vld [vmem:[%s3 + $0x38] sm:$0xff]
    %v126 = vld [vmem:[%s3 + $0x40] sm:$0xff]
    %v127 = vld [vmem:[%s3 + $0x48] sm:$0xff]
    %v128 = vld [vmem:[%s3 + $0x50] sm:$0xff]
    %v129 = vld [vmem:[%s3 + $0x58] sm:$0xff]
    %v130 = vld [vmem:[%s3 + $0x60] sm:$0xff]
    %v131 = vld [vmem:[%s3 + $0x68] sm:$0xff]
    %v132 = vld [vmem:[%s3 + $0x70] sm:$0xff]
    %v133 = vld [vmem:[%s3 + $0x78] sm:$0xff]
    %v134 = vld [vmem:[%s4] sm:$0x1]
    %v136 = vlaneseq
    %v137 = vshrl.u32 %v136, 7
    %v138 = vsub.s32 0, %v137
    %v139 = vrot.slane %v134, %v138
    %141 = vmatprep.subr.mxu0 0.0
    %142 = vmatpush1.msra.mxu0 %v133
    %143 = vmatprep.subr.mxu0 0.0
    %144 = vmatpush1.msra.mxu0 %v132
    %145 = vmatprep.subr.mxu0 0.0
    %146 = vmatpush1.msra.mxu0 %v131
    %147 = vmatprep.subr.mxu0 0.0
    %148 = vmatpush1.msra.mxu0 %v130
    %149 = vmatprep.subr.mxu0 0.0
    %150 = vmatpush1.msra.mxu0 %v129
    %151 = vmatprep.subr.mxu0 0.0
    %152 = vmatpush1.msra.mxu0 %v128
    %153 = vmatprep.subr.mxu0 0.0
    %154 = vmatpush1.msra.mxu0 %v127
    %155 = vmatprep.subr.mxu0 0.0
    %156 = vmatpush1.msra.mxu0 %v126
    %157 = vmatprep.subr.mxu0 0.0
    %158 = vmatpush1.msra.mxu0 %v125
    %159 = vmatprep.subr.mxu0 0.0
    %160 = vmatpush1.msra.mxu0 %v124
    %161 = vmatprep.subr.mxu0 0.0
    %162 = vmatpush1.msra.mxu0 %v123
    %163 = vmatprep.subr.mxu0 0.0
    %164 = vmatpush1.msra.mxu0 %v122
    %165 = vmatprep.subr.mxu0 0.0
    %166 = vmatpush1.msra.mxu0 %v121
    %167 = vmatprep.subr.mxu0 0.0
    %168 = vmatpush1.msra.mxu0 %v120
    %169 = vmatprep.subr.mxu0 0.0
    %170 = vmatpush1.msra.mxu0 %v119
    %171 = vmatprep.subr.mxu0 0.0
    %172 = vmatpush1.msra.mxu0 %v118
    %173 = vmatprep.subr.mxu0 0.0
    %174 = vmatpush2.msra.mxu0 0.0
    %175 = vmatprep.subr.mxu0 0.0
    %176 = vmatpush2.msra.mxu0 0.0
    %177 = vmatprep.subr.mxu0 0.0
    %178 = vmatpush2.msra.mxu0 0.0
    %179 = vmatprep.subr.mxu0 0.0
    %180 = vmatpush2.msra.mxu0 0.0
    %181 = vmatprep.subr.mxu0 0.0
    %182 = vmatpush2.msra.mxu0 0.0
    %183 = vmatprep.subr.mxu0 0.0
    %184 = vmatpush2.msra.mxu0 0.0
    %185 = vmatprep.subr.mxu0 0.0
    %186 = vmatpush2.msra.mxu0 0.0
    %187 = vmatprep.subr.mxu0 0.0
    %188 = vmatpush2.msra.mxu0 0.0
    %189 = vmatprep.subr.mxu0 0.0
    %190 = vmatpush2.msra.mxu0 0.0
    %191 = vmatprep.subr.mxu0 0.0
    %192 = vmatpush2.msra.mxu0 0.0
    %193 = vmatprep.subr.mxu0 0.0
    %194 = vmatpush2.msra.mxu0 0.0
    %195 = vmatprep.subr.mxu0 0.0
    %196 = vmatpush2.msra.mxu0 0.0
    %197 = vmatprep.subr.mxu0 0.0
    %198 = vmatpush2.msra.mxu0 0.0
    %199 = vmatprep.subr.mxu0 0.0
    %200 = vmatpush2.msra.mxu0 0.0
    %201 = vmatprep.subr.mxu0 0.0
    %202 = vmatpush2.msra.mxu0 0.0
    %203 = vmatprep.subr.mxu0 0.0
    %204 = vmatpush2.msra.mxu0 0.0
    %205 = vmatprep.mubr.f32.mxu0 0.0
    %206 = vmatmul.mubr.f32.gmra.mxu0 %v117
    %v207 = vpop.f32.mrf.mxu0
    %v208 = vadd.f32 %v139, %v207
    %v209 = vpop.f32.mrf.mxu0
    %210 = vdwg.mxu0
    %v211 = vmax.f32 %v208, 0.0
    %v212 = vld [vmem:[%s5] sm:$0xff]
    %v213 = vld [vmem:[%s5 + $0x8] sm:$0xff]
    %v214 = vld [vmem:[%s5 + $0x10] sm:$0xff]
    %v215 = vld [vmem:[%s5 + $0x18] sm:$0xff]
    %v216 = vld [vmem:[%s5 + $0x20] sm:$0xff]
    %v217 = vld [vmem:[%s5 + $0x28] sm:$0xff]
    %v218 = vld [vmem:[%s5 + $0x30] sm:$0xff]
    %v219 = vld [vmem:[%s5 + $0x38] sm:$0xff]
    %v220 = vld [vmem:[%s6] sm:$0x1]
    %v222 = vlaneseq
    %v223 = vshrl.u32 %v222, 7
    %v224 = vsub.s32 0, %v223
    %v225 = vrot.slane %v220, %v224
    %vm227 = vcmask 523264
    %v229 = vsel %vm227, %v211, 0
    %231 = vmatprep.subr.mxu0 0.0
    %232 = vmatpush1.msra.mxu0 0.0
    %233 = vmatprep.subr.mxu0 0.0
    %234 = vmatpush1.msra.mxu0 0.0
    %235 = vmatprep.subr.mxu0 0.0
    %236 = vmatpush1.msra.mxu0 0.0
    %237 = vmatprep.subr.mxu0 0.0
    %238 = vmatpush1.msra.mxu0 0.0
    %239 = vmatprep.subr.mxu0 0.0
    %240 = vmatpush1.msra.mxu0 0.0
    %241 = vmatprep.subr.mxu0 0.0
    %242 = vmatpush1.msra.mxu0 0.0
    %243 = vmatprep.subr.mxu0 0.0
    %244 = vmatpush1.msra.mxu0 0.0
    %245 = vmatprep.subr.mxu0 0.0
    %246 = vmatpush1.msra.mxu0 0.0
    %247 = vmatprep.subr.mxu0 0.0
    %248 = vmatpush1.msra.mxu0 %v219
    %249 = vmatprep.subr.mxu0 0.0
    %250 = vmatpush1.msra.mxu0 %v218
    %251 = vmatprep.subr.mxu0 0.0
    %252 = vmatpush1.msra.mxu0 %v217
    %253 = vmatprep.subr.mxu0 0.0
    %254 = vmatpush1.msra.mxu0 %v216
    %255 = vmatprep.subr.mxu0 0.0
    %256 = vmatpush1.msra.mxu0 %v215
    %257 = vmatprep.subr.mxu0 0.0
    %258 = vmatpush1.msra.mxu0 %v214
    %259 = vmatprep.subr.mxu0 0.0
    %260 = vmatpush1.msra.mxu0 %v213
    %261 = vmatprep.subr.mxu0 0.0
    %262 = vmatpush1.msra.mxu0 %v212
    %263 = vmatprep.subr.mxu0 0.0
    %264 = vmatpush2.msra.mxu0 0.0
    %265 = vmatprep.subr.mxu0 0.0
    %266 = vmatpush2.msra.mxu0 0.0
    %267 = vmatprep.subr.mxu0 0.0
    %268 = vmatpush2.msra.mxu0 0.0
    %269 = vmatprep.subr.mxu0 0.0
    %270 = vmatpush2.msra.mxu0 0.0
    %271 = vmatprep.subr.mxu0 0.0
    %272 = vmatpush2.msra.mxu0 0.0
    %273 = vmatprep.subr.mxu0 0.0
    %274 = vmatpush2.msra.mxu0 0.0
    %275 = vmatprep.subr.mxu0 0.0
    %276 = vmatpush2.msra.mxu0 0.0
    %277 = vmatprep.subr.mxu0 0.0
    %278 = vmatpush2.msra.mxu0 0.0
    %279 = vmatprep.subr.mxu0 0.0
    %280 = vmatpush2.msra.mxu0 0.0
    %281 = vmatprep.subr.mxu0 0.0
    %282 = vmatpush2.msra.mxu0 0.0
    %283 = vmatprep.subr.mxu0 0.0
    %284 = vmatpush2.msra.mxu0 0.0
    %285 = vmatprep.subr.mxu0 0.0
    %286 = vmatpush2.msra.mxu0 0.0
    %287 = vmatprep.subr.mxu0 0.0
    %288 = vmatpush2.msra.mxu0 0.0
    %289 = vmatprep.subr.mxu0 0.0
    %290 = vmatpush2.msra.mxu0 0.0
    %291 = vmatprep.subr.mxu0 0.0
    %292 = vmatpush2.msra.mxu0 0.0
    %293 = vmatprep.subr.mxu0 0.0
    %294 = vmatpush2.msra.mxu0 0.0
    %295 = vmatprep.mubr.f32.mxu0 0.0
    %296 = vmatmul.mubr.f32.gmra.mxu0 %v229
    %v297 = vpop.f32.mrf.mxu0
    %v298 = vadd.f32 %v225, %v297
    %v299 = vpop.f32.mrf.mxu0
    %300 = vdwg.mxu0
    %v301 = vmax.f32 %v298, 0.0
    %v302 = vld [vmem:[%s7] sm:$0xff]
    %v303 = vld [vmem:[%s7 + $0x8] sm:$0xff]
    %v304 = vld [vmem:[%s7 + $0x10] sm:$0xff]
    %v305 = vld [vmem:[%s7 + $0x18] sm:$0xff]
    %v306 = vld [vmem:[%s8] sm:$0x1]
    %v308 = vlaneseq
    %v309 = vshrl.u32 %v308, 7
    %v310 = vsub.s32 0, %v309
    %v311 = vrot.slane %v306, %v310
    %vm313 = vcmask 261120
    %v315 = vsel %vm313, %v301, 0
    %317 = vmatprep.subr.mxu0 0.0
    %318 = vmatpush1.msra.mxu0 0.0
    %319 = vmatprep.subr.mxu0 0.0
    %320 = vmatpush1.msra.mxu0 0.0
    %321 = vmatprep.subr.mxu0 0.0
    %322 = vmatpush1.msra.mxu0 0.0
    %323 = vmatprep.subr.mxu0 0.0
    %324 = vmatpush1.msra.mxu0 0.0
    %325 = vmatprep.subr.mxu0 0.0
    %326 = vmatpush1.msra.mxu0 0.0
    %327 = vmatprep.subr.mxu0 0.0
    %328 = vmatpush1.msra.mxu0 0.0
    %329 = vmatprep.subr.mxu0 0.0
    %330 = vmatpush1.msra.mxu0 0.0
    %331 = vmatprep.subr.mxu0 0.0
    %332 = vmatpush1.msra.mxu0 0.0
    %333 = vmatprep.subr.mxu0 0.0
    %334 = vmatpush1.msra.mxu0 0.0
    %335 = vmatprep.subr.mxu0 0.0
    %336 = vmatpush1.msra.mxu0 0.0
    %337 = vmatprep.subr.mxu0 0.0
    %338 = vmatpush1.msra.mxu0 0.0
    %339 = vmatprep.subr.mxu0 0.0
    %340 = vmatpush1.msra.mxu0 0.0
    %341 = vmatprep.subr.mxu0 0.0
    %342 = vmatpush1.msra.mxu0 %v305
    %343 = vmatprep.subr.mxu0 0.0
    %344 = vmatpush1.msra.mxu0 %v304
    %345 = vmatprep.subr.mxu0 0.0
    %346 = vmatpush1.msra.mxu0 %v303
    %347 = vmatprep.subr.mxu0 0.0
    %348 = vmatpush1.msra.mxu0 %v302
    %349 = vmatprep.subr.mxu0 0.0
    %350 = vmatpush2.msra.mxu0 0.0
    %351 = vmatprep.subr.mxu0 0.0
    %352 = vmatpush2.msra.mxu0 0.0
    %353 = vmatprep.subr.mxu0 0.0
    %354 = vmatpush2.msra.mxu0 0.0
    %355 = vmatprep.subr.mxu0 0.0
    %356 = vmatpush2.msra.mxu0 0.0
    %357 = vmatprep.subr.mxu0 0.0
    %358 = vmatpush2.msra.mxu0 0.0
    %359 = vmatprep.subr.mxu0 0.0
    %360 = vmatpush2.msra.mxu0 0.0
    %361 = vmatprep.subr.mxu0 0.0
    %362 = vmatpush2.msra.mxu0 0.0
    %363 = vmatprep.subr.mxu0 0.0
    %364 = vmatpush2.msra.mxu0 0.0
    %365 = vmatprep.subr.mxu0 0.0
    %366 = vmatpush2.msra.mxu0 0.0
    %367 = vmatprep.subr.mxu0 0.0
    %368 = vmatpush2.msra.mxu0 0.0
    %369 = vmatprep.subr.mxu0 0.0
    %370 = vmatpush2.msra.mxu0 0.0
    %371 = vmatprep.subr.mxu0 0.0
    %372 = vmatpush2.msra.mxu0 0.0
    %373 = vmatprep.subr.mxu0 0.0
    %374 = vmatpush2.msra.mxu0 0.0
    %375 = vmatprep.subr.mxu0 0.0
    %376 = vmatpush2.msra.mxu0 0.0
    %377 = vmatprep.subr.mxu0 0.0
    %378 = vmatpush2.msra.mxu0 0.0
    %379 = vmatprep.subr.mxu0 0.0
    %380 = vmatpush2.msra.mxu0 0.0
    %381 = vmatprep.mubr.f32.mxu0 0.0
    %382 = vmatmul.mubr.f32.gmra.mxu0 %v315
    %v383 = vpop.f32.mrf.mxu0
    %v384 = vadd.f32 %v311, %v383
    %v385 = vpop.f32.mrf.mxu0
    %386 = vdwg.mxu0
    %v387 = vmul.f32 %v384, 0.5
    %v388 = vtanh.pop %v387
    %v389 = vmul.f32 %v388, 0.5
    %v390 = vadd.f32 %v389, 0.5
    %vm391 = vcmask 80896
    %392 = vst.msk [vmem:[#allocation2] sm:$0xff] %vm391, %v390
    // Predicated region
    $region38: #{tpu_custom_call.1} parent=1 // pred_check
      _
    $region39: #{tpu_custom_call.1} parent=1 // pred_check_branch
      %394 = sbr.rel (0) target = $region41
    $region40: #{tpu_custom_call.1} parent=1 // pred_region
      %s396 = ssub.s32 128, 128
      %397 = vsyncadd [#allocation3], %s396
      %s399 = sshll.u32 [#allocation2], 4
      %s400 = int_to_ptr.vmem [resolvable:$true] %s399
      %402 = dma.vmem_to_hbm [thread:$0]  %s400, 128, %s9, [#allocation3]
    $region41: #{tpu_custom_call.1} parent=1 // pred_fallthru
      _
    // Predicated region
    $region42: #{tpu_custom_call.1} parent=1 // pred_check
      _
    $region43: #{tpu_custom_call.1} parent=1 // pred_check_branch
      %404 = sbr.rel (0) target = $region45
    $region44: #{tpu_custom_call.1} parent=1 // pred_region
      %405 = dma.done [#allocation3], 128
    $region45: #{tpu_custom_call.1} parent=1 // pred_fallthru
      _
    %406 = vsyncpa [#allocation3], 1

</llo_original>
